<compile_context>
chip_gen: v7x
topology: tpu7x:2x2x1
jax: 0.10.0
libtpu: 0.0.40
codegen_flags: <defaults>
</compile_context>

<pallas_src>
import functools
import math

import jax
import jax.numpy as jnp
from jax.experimental import pallas as pl
from jax.experimental.pallas import tpu as pltpu


# ----------------------------- Pallas kernels -----------------------------

def _gcn2_kernel(a_ref, x_ref, w1_ref, b1_ref, w2_ref, b2_ref, o_ref, *, sigmoid):
    """Both GCNConv layers fused: act(A @ (X W1) + b1) -> act(A @ (. W2) + b2).

    Matmul operands are bf16, accumulation f32; the (N, d) intermediate never
    leaves VMEM and A_norm is loaded once.
    """
    act = jax.nn.sigmoid if sigmoid else (lambda t: jnp.maximum(t, 0.0))
    a = a_ref[...]                                                   # bf16
    h = jnp.dot(x_ref[...], w1_ref[...], preferred_element_type=jnp.float32)
    h = act(jnp.dot(a, h.astype(jnp.bfloat16),
                    preferred_element_type=jnp.float32) + b1_ref[...])
    h = jnp.dot(h.astype(jnp.bfloat16), w2_ref[...],
                preferred_element_type=jnp.float32)
    o = act(jnp.dot(a, h.astype(jnp.bfloat16),
                    preferred_element_type=jnp.float32) + b2_ref[...])
    o_ref[...] = o.astype(o_ref.dtype)
    # TODO(synk): for large graphs, tile rows of A ('parallel') and the A-column
    # reduction ('arbitrary') with an f32 VMEM accumulator instead of whole-array.


def _encoder_stack_kernel(h0_ref, x_ref,
                          wq_ref, bq_ref, wkv_ref, bkv_ref, wo_ref, bo_ref,
                          ln1g_ref, ln1b_ref, w1_ref, b1_ref, w2_ref, b2_ref,
                          ln2g_ref, ln2b_ref,
                          o_ref, h_carry, ctx_ref, *, n_heads, eps):
    """Whole post-norm cross-attention encoder stack, one grid step per layer.

    grid=(num_layers,) 'arbitrary'; h is carried in VMEM scratch across layers and
    the output is written only on the last layer. All matmuls are bf16-in / f32-acc,
    elementwise (softmax, LayerNorm, residual) math stays f32.
    """
    layer = pl.program_id(0)
    n_layers = pl.num_programs(0)
    B, M, D = h_carry.shape
    R = B * M
    dk = D // n_heads
    scale = 1.0 / math.sqrt(dk)

    @pl.when(layer == 0)
    def _():
        h_carry[...] = h0_ref[...]

    hf = h_carry[...].reshape(R, D)            # f32 residual stream
    xf = x_ref[...].reshape(R, D)              # bf16 K/V source (GCN output)

    # --- fused, lane-dense projections: Q from h, K|V from x ---
    q = jnp.dot(hf.astype(jnp.bfloat16), wq_ref[...],
                preferred_element_type=jnp.float32) + bq_ref[...]
    kv = jnp.dot(xf, wkv_ref[...],
                 preferred_element_type=jnp.float32) + bkv_ref[...]
    q = (q * scale).astype(jnp.bfloat16)
    k = kv[:, :D].astype(jnp.bfloat16)
    v = kv[:, D:].astype(jnp.bfloat16)

    # --- per-head attention: static lane slices, ctx stays head-merged ---
    # TODO(synk): for long sequences, tile the K/V axis (online softmax) instead of
    # materializing the full (B, M, M) score matrix.
    for head in range(n_heads):                       # static unroll (n_heads small)
        sl = slice(head * dk, (head + 1) * dk)
        qh = q[:, sl].reshape(B, M, dk)
        kh = k[:, sl].reshape(B, M, dk)
        vh = v[:, sl].reshape(B, M, dk)
        s = jnp.einsum('bqd,bkd->bqk', qh, kh, preferred_element_type=jnp.float32)
        s = s - jnp.max(s, axis=-1, keepdims=True)
        p = jnp.exp(s)
        p = p * pl.reciprocal(jnp.sum(p, axis=-1, keepdims=True), approx=True)
        oh = jnp.einsum('bqk,bkd->bqd', p.astype(jnp.bfloat16), vh,
                        preferred_element_type=jnp.float32)
        ctx_ref[:, sl] = oh.reshape(R, dk)

    # single full-depth output projection over the head-merged context
    attn = jnp.dot(ctx_ref[...].astype(jnp.bfloat16), wo_ref[...],
                   preferred_element_type=jnp.float32) + bo_ref[...]

    # --- residual + LayerNorm 1 (f32) ---
    z = hf + attn
    mu = jnp.mean(z, axis=-1, keepdims=True)
    var = jnp.mean((z - mu) ** 2, axis=-1, keepdims=True)
    h1 = (z - mu) * jax.lax.rsqrt(var + eps) * ln1g_ref[...] + ln1b_ref[...]

    # --- FFN + residual + LayerNorm 2 ---
    f = jnp.dot(h1.astype(jnp.bfloat16), w1_ref[...],
                preferred_element_type=jnp.float32) + b1_ref[...]
    f = jnp.maximum(f, 0.0)
    f = jnp.dot(f.astype(jnp.bfloat16), w2_ref[...],
                preferred_element_type=jnp.float32) + b2_ref[...]
    z2 = h1 + f
    mu2 = jnp.mean(z2, axis=-1, keepdims=True)
    var2 = jnp.mean((z2 - mu2) ** 2, axis=-1, keepdims=True)
    y = (z2 - mu2) * jax.lax.rsqrt(var2 + eps) * ln2g_ref[...] + ln2b_ref[...]

    h_carry[...] = y.reshape(B, M, D)

    @pl.when(layer == n_layers - 1)
    def _():
        o_ref[...] = y.reshape(B, M, D)


# ----------------------------- thin wrappers -----------------------------

def gcn_two_convs(a_norm, x, prep, activation="relu"):
    n = x.shape[0]
    d_out = prep["conv2_w"].shape[1]
    return pl.pallas_call(
        functools.partial(_gcn2_kernel, sigmoid=(activation == "sigmoid")),
        out_shape=jax.ShapeDtypeStruct((n, d_out), jnp.bfloat16),
    )(a_norm.astype(jnp.bfloat16), x.astype(jnp.bfloat16),
      prep["conv1_w"], prep["conv1_b"], prep["conv2_w"], prep["conv2_b"])


def encoder_stack(h0, x, prep, n_heads, eps=1e-5):
    B, M, D = h0.shape
    L = prep["wq"].shape[0]

    whole = pl.BlockSpec((B, M, D), lambda l: (0, 0, 0))

    def layer_spec(arr):
        return pl.BlockSpec((None,) + arr.shape[1:], lambda l: (l, 0, 0))

    operands = (
        h0, x,
        prep["wq"], prep["bq"], prep["wkv"], prep["bkv"],
        prep["wo"], prep["bo"], prep["ln1_g"], prep["ln1_b"],
        prep["w1"], prep["b1"], prep["w2"], prep["b2"],
        prep["ln2_g"], prep["ln2_b"],
    )
    in_specs = [whole, whole] + [layer_spec(op) for op in operands[2:]]

    return pl.pallas_call(
        functools.partial(_encoder_stack_kernel, n_heads=n_heads, eps=eps),
        grid=(L,),
        in_specs=in_specs,
        out_specs=whole,
        out_shape=jax.ShapeDtypeStruct((B, M, D), jnp.float32),
        scratch_shapes=[pltpu.VMEM((B, M, D), jnp.float32),    # residual carry
                        pltpu.VMEM((B * M, D), jnp.float32)],  # head-merged context
        compiler_params=pltpu.CompilerParams(
            dimension_semantics=("arbitrary",),
            vmem_limit_bytes=48 * 1024 * 1024),
    )(*operands)


# ----------------------------- model forward -----------------------------

def gcn_forward(prep, enc_out_vari, x_enc, x_raw, a_norm, n_heads,
                activation="relu"):
    del x_enc  # unused in the reference forward
    B, M, d_model = enc_out_vari.shape

    # GCN branch: both convs + activations fused (dropout == identity in eval)
    x2 = gcn_two_convs(a_norm, x_raw, prep, activation)
    x = x2.reshape(B, M, d_model)                                  # bf16 K/V source

    # Transformer encoder: the whole stack in ONE pallas_call
    return encoder_stack(enc_out_vari, x, prep, n_heads)


# ----------------------------- params / prep -----------------------------

def init_params(key, d_model, d_ff, num_layers):
    def w(key, shape, scale=0.02):
        return scale * jax.random.normal(key, shape, dtype=jnp.float32)

    keys = jax.random.split(key, 2 + num_layers)
    params = {
        "conv1_w": w(keys[0], (d_model, d_model)),
        "conv1_b": jnp.zeros((d_model,), jnp.float32),
        "conv2_w": w(keys[1], (d_model, d_model)),
        "conv2_b": jnp.zeros((d_model,), jnp.float32),
        "layers": [],
    }
    for l in range(num_layers):
        lk = jax.random.split(keys[2 + l], 6)
        params["layers"].append({
            "wq": w(lk[0], (d_model, d_model)), "bq": jnp.zeros((d_model,), jnp.float32),
            "wk": w(lk[1], (d_model, d_model)), "bk": jnp.zeros((d_model,), jnp.float32),
            "wv": w(lk[2], (d_model, d_model)), "bv": jnp.zeros((d_model,), jnp.float32),
            "wo": w(lk[3], (d_model, d_model)), "bo": jnp.zeros((d_model,), jnp.float32),
            "ln1_g": jnp.ones((d_model,), jnp.float32),
            "ln1_b": jnp.zeros((d_model,), jnp.float32),
            "w1": w(lk[4], (d_model, d_ff)), "b1": jnp.zeros((d_ff,), jnp.float32),
            "w2": w(lk[5], (d_ff, d_model)), "b2": jnp.zeros((d_model,), jnp.float32),
            "ln2_g": jnp.ones((d_model,), jnp.float32),
            "ln2_b": jnp.zeros((d_model,), jnp.float32),
        })
    return params


def prepare_params(params):
    """One-time host-side weight prep: stack layers, concat K|V, cast MXU operands to
    bf16.  (NOTE: kernels compute x @ W; porting real torch weights requires W^T.)"""
    bf = jnp.bfloat16

    def stack(name):
        return jnp.stack([lp[name] for lp in params["layers"]])

    prep = {
        "conv1_w": params["conv1_w"].astype(bf),
        "conv1_b": params["conv1_b"].reshape(1, -1),
        "conv2_w": params["conv2_w"].astype(bf),
        "conv2_b": params["conv2_b"].reshape(1, -1),
        "wq": stack("wq").astype(bf),                                    # (L, D, D)
        "bq": stack("bq")[:, None, :],                                   # (L, 1, D)
        "wkv": jnp.concatenate([stack("wk"), stack("wv")], -1).astype(bf),  # (L, D, 2D)
        "bkv": jnp.concatenate([stack("bk"), stack("bv")], -1)[:, None, :],
        "wo": stack("wo").astype(bf),
        "bo": stack("bo")[:, None, :],
        "ln1_g": stack("ln1_g")[:, None, :],
        "ln1_b": stack("ln1_b")[:, None, :],
        "w1": stack("w1").astype(bf),                                    # (L, D, d_ff)
        "b1": stack("b1")[:, None, :],
        "w2": stack("w2").astype(bf),                                    # (L, d_ff, D)
        "b2": stack("b2")[:, None, :],
        "ln2_g": stack("ln2_g")[:, None, :],
        "ln2_b": stack("ln2_b")[:, None, :],
    }
    return prep


def build_normalized_adjacency(edge_index, num_nodes):
    # Symmetric GCN normalization: D^-1/2 (A + I) D^-1/2 (dense; plain JAX glue)
    a = jnp.zeros((num_nodes, num_nodes), jnp.float32)
    a = a.at[edge_index[0], edge_index[1]].set(1.0)
    a_hat = a + jnp.eye(num_nodes, dtype=jnp.float32)
    deg = a_hat.sum(axis=1)
    d_inv_sqrt = 1.0 / jnp.sqrt(deg)
    return a_hat * d_inv_sqrt[:, None] * d_inv_sqrt[None, :]


if __name__ == "__main__":
    # hidden_channels == in_channels == d_model (required by x2.reshape(B, M, d_model))
    B, M = 2, 8
    d_model = 32
    d_ff = 64
    n_heads = 4
    num_layers = 2
    N = B * M

    key = jax.random.PRNGKey(0)
    k_p, k_enc, k_raw = jax.random.split(key, 3)

    params = init_params(k_p, d_model, d_ff, num_layers)
    prep = prepare_params(params)
    enc_out_vari = jax.random.normal(k_enc, (B, M, d_model), dtype=jnp.float32)
    x_raw = jax.random.normal(k_raw, (N, d_model), dtype=jnp.float32)

    # block-diagonal ring graph per batch, undirected (both edge directions)
    src, dst = [], []
    for bb in range(B):
        for i in range(M):
            u = bb * M + i
            v = bb * M + (i + 1) % M
            src += [u, v]
            dst += [v, u]
    edge_index = jnp.array([src, dst], dtype=jnp.int32)   # (2, E)
    a_norm = build_normalized_adjacency(edge_index, N)

    out = gcn_forward(prep, enc_out_vari, None, x_raw, a_norm, n_heads)
    out = jax.block_until_ready(out)
    assert out.shape == (B, M, d_model)
    assert jnp.all(jnp.isfinite(out))
    print("KERNEL_OK")
</pallas_src>

<mosaic_0001>
module attributes {stable_mosaic.version = 11 : i64} {
  func.func @_gcn2_kernel(%arg0: memref<16x16xbf16, #tpu.memory_space<vmem>>, %arg1: memref<16x32xbf16, #tpu.memory_space<vmem>>, %arg2: memref<32x32xbf16, #tpu.memory_space<vmem>>, %arg3: memref<1x32xf32, #tpu.memory_space<vmem>>, %arg4: memref<32x32xbf16, #tpu.memory_space<vmem>>, %arg5: memref<1x32xf32, #tpu.memory_space<vmem>>, %arg6: memref<16x32xbf16, #tpu.memory_space<vmem>>) attributes {dimension_semantics = [], scalar_prefetch = 0 : i64, scratch_operands = 0 : i64, tpu.core_type = #tpu.core_type<tc>} {
    %c0 = arith.constant 0 : index
    %c0_0 = arith.constant 0 : index
    %0 = vector.load %arg0[%c0, %c0_0] : memref<16x16xbf16, #tpu.memory_space<vmem>>, vector<16x16xbf16>
    %c0_1 = arith.constant 0 : index
    %c0_2 = arith.constant 0 : index
    %1 = vector.load %arg1[%c0_1, %c0_2] : memref<16x32xbf16, #tpu.memory_space<vmem>>, vector<16x32xbf16>
    %c0_3 = arith.constant 0 : index
    %c0_4 = arith.constant 0 : index
    %2 = vector.load %arg2[%c0_3, %c0_4] : memref<32x32xbf16, #tpu.memory_space<vmem>>, vector<32x32xbf16>
    %cst = arith.constant dense<0.000000e+00> : vector<16x32xf32>
    %3 = tpu.matmul %1, %2, %cst {dimension_numbers = #tpu.dot_dimension_numbers<[1], [0], [0], [1], [0, 0, 1, 1], [], []>} : vector<16x32xbf16>, vector<32x32xbf16>, vector<16x32xf32> -> vector<16x32xf32>
    %4 = arith.truncf %3 : vector<16x32xf32> to vector<16x32xbf16>
    %cst_5 = arith.constant dense<0.000000e+00> : vector<16x32xf32>
    %5 = tpu.matmul %0, %4, %cst_5 {dimension_numbers = #tpu.dot_dimension_numbers<[1], [0], [0], [1], [0, 0, 1, 1], [], []>} : vector<16x16xbf16>, vector<16x32xbf16>, vector<16x32xf32> -> vector<16x32xf32>
    %c0_6 = arith.constant 0 : index
    %c0_7 = arith.constant 0 : index
    %6 = vector.load %arg3[%c0_6, %c0_7] : memref<1x32xf32, #tpu.memory_space<vmem>>, vector<1x32xf32>
    %7 = vector.broadcast %6 : vector<1x32xf32> to vector<16x32xf32>
    %8 = arith.addf %5, %7 : vector<16x32xf32>
    %cst_8 = arith.constant 0.000000e+00 : f32
    %9 = vector.broadcast %cst_8 : f32 to vector<16x32xf32>
    %10 = arith.maximumf %8, %9 : vector<16x32xf32>
    %11 = arith.truncf %10 : vector<16x32xf32> to vector<16x32xbf16>
    %c0_9 = arith.constant 0 : index
    %c0_10 = arith.constant 0 : index
    %12 = vector.load %arg4[%c0_9, %c0_10] : memref<32x32xbf16, #tpu.memory_space<vmem>>, vector<32x32xbf16>
    %cst_11 = arith.constant dense<0.000000e+00> : vector<16x32xf32>
    %13 = tpu.matmul %11, %12, %cst_11 {dimension_numbers = #tpu.dot_dimension_numbers<[1], [0], [0], [1], [0, 0, 1, 1], [], []>} : vector<16x32xbf16>, vector<32x32xbf16>, vector<16x32xf32> -> vector<16x32xf32>
    %14 = arith.truncf %13 : vector<16x32xf32> to vector<16x32xbf16>
    %cst_12 = arith.constant dense<0.000000e+00> : vector<16x32xf32>
    %15 = tpu.matmul %0, %14, %cst_12 {dimension_numbers = #tpu.dot_dimension_numbers<[1], [0], [0], [1], [0, 0, 1, 1], [], []>} : vector<16x16xbf16>, vector<16x32xbf16>, vector<16x32xf32> -> vector<16x32xf32>
    %c0_13 = arith.constant 0 : index
    %c0_14 = arith.constant 0 : index
    %16 = vector.load %arg5[%c0_13, %c0_14] : memref<1x32xf32, #tpu.memory_space<vmem>>, vector<1x32xf32>
    %17 = vector.broadcast %16 : vector<1x32xf32> to vector<16x32xf32>
    %18 = arith.addf %15, %17 : vector<16x32xf32>
    %cst_15 = arith.constant 0.000000e+00 : f32
    %19 = vector.broadcast %cst_15 : f32 to vector<16x32xf32>
    %20 = arith.maximumf %18, %19 : vector<16x32xf32>
    %21 = arith.truncf %20 : vector<16x32xf32> to vector<16x32xbf16>
    %c0_16 = arith.constant 0 : index
    %c0_17 = arith.constant 0 : index
    %22 = vector.load %arg6[%c0_16, %c0_17] : memref<16x32xbf16, #tpu.memory_space<vmem>>, vector<16x32xbf16>
    tpu.vector_store %arg6[%c0_16, %c0_17], %21 {strides = array<i32>} : memref<16x32xbf16, #tpu.memory_space<vmem>>, vector<16x32xbf16>,
    return
  }
}

</mosaic_0001>

<llo_original>
// kernel: tpu_custom_call.1
$region0: #{tpu_custom_call.1}
  #allocation0 [shape = 'u32[]', space=smem, size = 0x4, offset = 0x4, fixed_abs, tag = 'smem constant byte address 0x4 - core index']
  #allocation1 [shape = 'u32[144,128]{1,0:T(1,128)}', space=vmem, size = 0x12000, scoped, tag = 'internal scratch']
  %s0 = inlined_call_operand.hbm [shape: bf16[16,16], index: 0, kind: input, shape index: {}]
  %s1 = inlined_call_operand.hbm [shape: bf16[16,32], index: 1, kind: input, shape index: {}]
  %s2 = inlined_call_operand.hbm [shape: bf16[32,32], index: 2, kind: input, shape index: {}]
  %s3 = inlined_call_operand.vmem [shape: f32[1,32], index: 3, kind: input, shape index: {}]
  %s4 = inlined_call_operand.hbm [shape: bf16[32,32], index: 4, kind: input, shape index: {}]
  %s5 = inlined_call_operand.vmem [shape: f32[1,32], index: 5, kind: input, shape index: {}]
  %s6 = inlined_call_operand.hbm [shape: bf16[16,32], index: 6, kind: output, shape index: {}]
  %s7 = sld [smem:[#allocation0]]
  $region50: #{tpu_custom_call.1} parent=0
    _
  %s9 = ssub.s32 1, %s7
  %s10 = scalar_select 0, %s9, %s7
  $region1: #{tpu_custom_call.1} parent=0
    #allocation2 [shape = 'u8[4096]{0}', space=vmem, size = 0x1000, scoped, tag = 'input window, operand 0, single buffered']
    #allocation3 [shape = 's32[1]{0}', space=sflag, size = 0x4, scoped, tag = 'scoped memory for tpu_custom_call.1']
    #allocation4 [shape = 's32[1]{0}', space=sflag, size = 0x4, scoped, tag = 'scoped memory for tpu_custom_call.1']
    #allocation5 [shape = 'u8[4096]{0}', space=vmem, size = 0x1000, scoped, tag = 'input window, operand 1, single buffered']
    #allocation6 [shape = 's32[1]{0}', space=sflag, size = 0x4, scoped, tag = 'scoped memory for tpu_custom_call.1']
    #allocation7 [shape = 'u8[8192]{0}', space=vmem, size = 0x2000, scoped, tag = 'input window, operand 2, single buffered']
    #allocation8 [shape = 'u8[8192]{0}', space=vmem, size = 0x2000, scoped, tag = 'input window, operand 4, single buffered']
    #allocation9 [shape = 's32[1]{0}', space=sflag, size = 0x4, scoped, tag = 'scoped memory for tpu_custom_call.1']
    #allocation10 [shape = 'u8[4096]{0}', space=vmem, size = 0x1000, scoped, tag = 'output window, operand 0, single buffered']
    %11 = vsyncpa [#allocation3], 0
    %12 = vsyncpa [#allocation6], 0
    %13 = vsyncpa [#allocation9], 0
    %14 = vsyncpa [#allocation4], 0
    // Predicated region
    $region2: #{tpu_custom_call.1} parent=1 // pred_check
      _
    $region3: #{tpu_custom_call.1} parent=1 // pred_check_branch
      %16 = sbr.rel (0) target = $region5
    $region4: #{tpu_custom_call.1} parent=1 // pred_region
      %s18 = ssub.s32 128, 128
      %19 = vsyncadd [#allocation3], %s18
      %s20 = sshll.u32 [#allocation2], 4
      %s21 = int_to_ptr.vmem [resolvable:$true] %s20
      %26 = dma.hbm_to_vmem [thread:$0]  %s0, 128, %s21, [#allocation3], 64, 64, 4
    $region5: #{tpu_custom_call.1} parent=1 // pred_fallthru
      _
    // Predicated region
    $region6: #{tpu_custom_call.1} parent=1 // pred_check
      _
    $region7: #{tpu_custom_call.1} parent=1 // pred_check_branch
      %28 = sbr.rel (0) target = $region9
    $region8: #{tpu_custom_call.1} parent=1 // pred_region
      %s30 = ssub.s32 128, 128
      %31 = vsyncadd [#allocation6], %s30
      %s32 = sshll.u32 [#allocation5], 4
      %s33 = int_to_ptr.vmem [resolvable:$true] %s32
      %38 = dma.hbm_to_vmem [thread:$0]  %s1, 128, %s33, [#allocation6], 64, 64, 4
    $region9: #{tpu_custom_call.1} parent=1 // pred_fallthru
      _
    // Predicated region
    $region10: #{tpu_custom_call.1} parent=1 // pred_check
      _
    $region11: #{tpu_custom_call.1} parent=1 // pred_check_branch
      %40 = sbr.rel (0) target = $region13
    $region12: #{tpu_custom_call.1} parent=1 // pred_region
      %s42 = ssub.s32 256, 256
      %43 = vsyncadd [#allocation6], %s42
      %s44 = sshll.u32 [#allocation7], 4
      %s45 = int_to_ptr.vmem [resolvable:$true] %s44
      %50 = dma.hbm_to_vmem [thread:$0]  %s2, 256, %s45, [#allocation6], 64, 64, 4
    $region13: #{tpu_custom_call.1} parent=1 // pred_fallthru
      _
    // Predicated region
    $region14: #{tpu_custom_call.1} parent=1 // pred_check
      _
    $region15: #{tpu_custom_call.1} parent=1 // pred_check_branch
      %52 = sbr.rel (0) target = $region17
    $region16: #{tpu_custom_call.1} parent=1 // pred_region
      _
    $region17: #{tpu_custom_call.1} parent=1 // pred_fallthru
      _
    // Predicated region
    $region18: #{tpu_custom_call.1} parent=1 // pred_check
      _
    $region19: #{tpu_custom_call.1} parent=1 // pred_check_branch
      %54 = sbr.rel (0) target = $region21
    $region20: #{tpu_custom_call.1} parent=1 // pred_region
      %s56 = ssub.s32 256, 256
      %57 = vsyncadd [#allocation9], %s56
      %s58 = sshll.u32 [#allocation8], 4
      %s59 = int_to_ptr.vmem [resolvable:$true] %s58
      %64 = dma.hbm_to_vmem [thread:$0]  %s4, 256, %s59, [#allocation9], 64, 64, 4
    $region21: #{tpu_custom_call.1} parent=1 // pred_fallthru
      _
    // Predicated region
    $region22: #{tpu_custom_call.1} parent=1 // pred_check
      _
    $region23: #{tpu_custom_call.1} parent=1 // pred_check_branch
      %66 = sbr.rel (0) target = $region25
    $region24: #{tpu_custom_call.1} parent=1 // pred_region
      _
    $region25: #{tpu_custom_call.1} parent=1 // pred_fallthru
      _
    // Predicated region
    $region26: #{tpu_custom_call.1} parent=1 // pred_check
      _
    $region27: #{tpu_custom_call.1} parent=1 // pred_check_branch
      %68 = sbr.rel (0) target = $region29
    $region28: #{tpu_custom_call.1} parent=1 // pred_region
      %69 = dma.done [#allocation3], 128
    $region29: #{tpu_custom_call.1} parent=1 // pred_fallthru
      _
    // Predicated region
    $region30: #{tpu_custom_call.1} parent=1 // pred_check
      _
    $region31: #{tpu_custom_call.1} parent=1 // pred_check_branch
      %71 = sbr.rel (0) target = $region33
    $region32: #{tpu_custom_call.1} parent=1 // pred_region
      %72 = dma.done [#allocation6], 128
    $region33: #{tpu_custom_call.1} parent=1 // pred_fallthru
      _
    // Predicated region
    $region34: #{tpu_custom_call.1} parent=1 // pred_check
      _
    $region35: #{tpu_custom_call.1} parent=1 // pred_check_branch
      %74 = sbr.rel (0) target = $region37
    $region36: #{tpu_custom_call.1} parent=1 // pred_region
      %75 = dma.done [#allocation6], 256
    $region37: #{tpu_custom_call.1} parent=1 // pred_fallthru
      _
    // Predicated region
    $region38: #{tpu_custom_call.1} parent=1 // pred_check
      _
    $region39: #{tpu_custom_call.1} parent=1 // pred_check_branch
      %77 = sbr.rel (0) target = $region41
    $region40: #{tpu_custom_call.1} parent=1 // pred_region
      %78 = dma.done [#allocation9], 256
    $region41: #{tpu_custom_call.1} parent=1 // pred_fallthru
      _
    %v80 = vld [vmem:[#allocation2] sm:$0xf]
    %v81 = vld [vmem:[#allocation2 + $0x4] sm:$0xf]
    %v82 = vld [vmem:[#allocation5] sm:$0xf]
    %v83 = vld [vmem:[#allocation5 + $0x4] sm:$0xf]
    %v84 = vld [vmem:[#allocation7] sm:$0xf]
    %v85 = vld [vmem:[#allocation7 + $0x4] sm:$0xf]
    %v86 = vld [vmem:[#allocation7 + $0x8] sm:$0xf]
    %v87 = vld [vmem:[#allocation7 + $0xc] sm:$0xf]
    %v90 = vunpack.c.l.b16 %v82
    %v91 = vunpack.c.l.b16 %v83
    %v92 = vpack.c.b16 %v91, %v90
    %v97 = vunpack.c.l.b16 %v84
    %v98 = vunpack.c.l.b16 %v85
    %v99 = vunpack.c.l.b16 %v86
    %v100 = vunpack.c.l.b16 %v87
    %v101 = vpack.c.b16 %v98, %v97
    %v102 = vpack.c.b16 %v100, %v99
    %vm105 = vcmask 261120
    %v107 = vsel %vm105, %v92, 0
    %109 = vmatprep.subr.bf16.mxu0 0
    %110 = vmatpush1.bf16.msra.mxu0 %v101
    %111 = vmatprep.subr.bf16.mxu0 0
    %112 = vmatpush1.bf16.msra.mxu0 %v102
    %113 = vmatprep.subr.bf16.mxu0 0
    %114 = vmatpush1.bf16.msra.mxu0 0
    %115 = vmatprep.subr.bf16.mxu0 0
    %116 = vmatpush1.bf16.msra.mxu0 0
    %117 = vmatprep.subr.bf16.mxu0 0
    %118 = vmatpush1.bf16.msra.mxu0 0
    %119 = vmatprep.subr.bf16.mxu0 0
    %120 = vmatpush1.bf16.msra.mxu0 0
    %121 = vmatprep.subr.bf16.mxu0 0
    %122 = vmatpush1.bf16.msra.mxu0 0
    %123 = vmatprep.subr.bf16.mxu0 0
    %124 = vmatpush1.bf16.msra.mxu0 0
    %125 = vmatprep.subr.bf16.mxu0 0
    %126 = vmatpush1.bf16.msra.mxu0 0
    %127 = vmatprep.subr.bf16.mxu0 0
    %128 = vmatpush1.bf16.msra.mxu0 0
    %129 = vmatprep.subr.bf16.mxu0 0
    %130 = vmatpush1.bf16.msra.mxu0 0
    %131 = vmatprep.subr.bf16.mxu0 0
    %132 = vmatpush1.bf16.msra.mxu0 0
    %133 = vmatprep.subr.bf16.mxu0 0
    %134 = vmatpush1.bf16.msra.mxu0 0
    %135 = vmatprep.subr.bf16.mxu0 0
    %136 = vmatpush1.bf16.msra.mxu0 0
    %137 = vmatprep.subr.bf16.mxu0 0
    %138 = vmatpush1.bf16.msra.mxu0 0
    %139 = vmatprep.subr.bf16.mxu0 0
    %140 = vmatpush1.bf16.msra.mxu0 0
    %141 = vmatprep.mubr.bf16.mxu0 0
    %142 = vmatmul.mubr.bf16.gmra.mrb[0].mxu0 %v107
    %v143 = vpop.f32.mrb[0].mxu0
    %v144 = vadd.f32 0.0, %v143
    %v145 = vpop.f32.mrb[0].mxu0
    %v146 = vpop.f32.mrb[0].mxu0
    %v147 = vadd.f32 0.0, %v146
    %v148 = vpop.f32.mrb[0].mxu0
    %149 = vdwg.mxu0
    %v150 = vpack.c.bf16 %v147, %v144
    %v151 = vld [vmem:[%s3] sm:$0x1]
    %v153 = vlaneseq
    %v154 = vshrl.u32 %v153, 7
    %v155 = vsub.s32 0, %v154
    %v156 = vrot.slane %v151, %v155
    %v160 = vunpack.c.l.b16 %v80
    %v161 = vunpack.c.l.b16 %v81
    %v162 = vpack.c.b16 %v161, %v160
    %vm163 = vcmask 130048
    %v165 = vsel %vm163, %v162, 0
    %167 = vmatprep.subr.bf16.mxu0 0
    %168 = vmatpush1.bf16.msra.mxu0 %v150
    %169 = vmatprep.subr.bf16.mxu0 0
    %170 = vmatpush1.bf16.msra.mxu0 0
    %171 = vmatprep.subr.bf16.mxu0 0
    %172 = vmatpush1.bf16.msra.mxu0 0
    %173 = vmatprep.subr.bf16.mxu0 0
    %174 = vmatpush1.bf16.msra.mxu0 0
    %175 = vmatprep.subr.bf16.mxu0 0
    %176 = vmatpush1.bf16.msra.mxu0 0
    %177 = vmatprep.subr.bf16.mxu0 0
    %178 = vmatpush1.bf16.msra.mxu0 0
    %179 = vmatprep.subr.bf16.mxu0 0
    %180 = vmatpush1.bf16.msra.mxu0 0
    %181 = vmatprep.subr.bf16.mxu0 0
    %182 = vmatpush1.bf16.msra.mxu0 0
    %183 = vmatprep.subr.bf16.mxu0 0
    %184 = vmatpush1.bf16.msra.mxu0 0
    %185 = vmatprep.subr.bf16.mxu0 0
    %186 = vmatpush1.bf16.msra.mxu0 0
    %187 = vmatprep.subr.bf16.mxu0 0
    %188 = vmatpush1.bf16.msra.mxu0 0
    %189 = vmatprep.subr.bf16.mxu0 0
    %190 = vmatpush1.bf16.msra.mxu0 0
    %191 = vmatprep.subr.bf16.mxu0 0
    %192 = vmatpush1.bf16.msra.mxu0 0
    %193 = vmatprep.subr.bf16.mxu0 0
    %194 = vmatpush1.bf16.msra.mxu0 0
    %195 = vmatprep.subr.bf16.mxu0 0
    %196 = vmatpush1.bf16.msra.mxu0 0
    %197 = vmatprep.subr.bf16.mxu0 0
    %198 = vmatpush1.bf16.msra.mxu0 0
    %199 = vmatprep.mubr.bf16.mxu0 0
    %200 = vmatmul.mubr.bf16.gmra.mrb[0].mxu0 %v165
    %v201 = vpop.f32.mrb[0].mxu0
    %v202 = vadd.f32 %v156, %v201
    %v203 = vpop.f32.mrb[0].mxu0
    %v204 = vpop.f32.mrb[0].mxu0
    %v205 = vadd.f32 %v156, %v204
    %v206 = vpop.f32.mrb[0].mxu0
    %207 = vdwg.mxu0
    %v208 = vmax.f32 %v202, 0.0
    %v209 = vmax.f32 %v205, 0.0
    %v210 = vpack.c.bf16 %v209, %v208
    %v211 = vld [vmem:[#allocation8] sm:$0xf]
    %v212 = vld [vmem:[#allocation8 + $0x4] sm:$0xf]
    %v213 = vld [vmem:[#allocation8 + $0x8] sm:$0xf]
    %v214 = vld [vmem:[#allocation8 + $0xc] sm:$0xf]
    %v219 = vunpack.c.l.b16 %v211
    %v220 = vunpack.c.l.b16 %v212
    %v221 = vunpack.c.l.b16 %v213
    %v222 = vunpack.c.l.b16 %v214
    %v223 = vpack.c.b16 %v220, %v219
    %v224 = vpack.c.b16 %v222, %v221
    %v228 = vsel %vm105, %v210, 0
    %230 = vmatprep.subr.bf16.mxu0 0
    %231 = vmatpush1.bf16.msra.mxu0 %v223
    %232 = vmatprep.subr.bf16.mxu0 0
    %233 = vmatpush1.bf16.msra.mxu0 %v224
    %234 = vmatprep.subr.bf16.mxu0 0
    %235 = vmatpush1.bf16.msra.mxu0 0
    %236 = vmatprep.subr.bf16.mxu0 0
    %237 = vmatpush1.bf16.msra.mxu0 0
    %238 = vmatprep.subr.bf16.mxu0 0
    %239 = vmatpush1.bf16.msra.mxu0 0
    %240 = vmatprep.subr.bf16.mxu0 0
    %241 = vmatpush1.bf16.msra.mxu0 0
    %242 = vmatprep.subr.bf16.mxu0 0
    %243 = vmatpush1.bf16.msra.mxu0 0
    %244 = vmatprep.subr.bf16.mxu0 0
    %245 = vmatpush1.bf16.msra.mxu0 0
    %246 = vmatprep.subr.bf16.mxu0 0
    %247 = vmatpush1.bf16.msra.mxu0 0
    %248 = vmatprep.subr.bf16.mxu0 0
    %249 = vmatpush1.bf16.msra.mxu0 0
    %250 = vmatprep.subr.bf16.mxu0 0
    %251 = vmatpush1.bf16.msra.mxu0 0
    %252 = vmatprep.subr.bf16.mxu0 0
    %253 = vmatpush1.bf16.msra.mxu0 0
    %254 = vmatprep.subr.bf16.mxu0 0
    %255 = vmatpush1.bf16.msra.mxu0 0
    %256 = vmatprep.subr.bf16.mxu0 0
    %257 = vmatpush1.bf16.msra.mxu0 0
    %258 = vmatprep.subr.bf16.mxu0 0
    %259 = vmatpush1.bf16.msra.mxu0 0
    %260 = vmatprep.subr.bf16.mxu0 0
    %261 = vmatpush1.bf16.msra.mxu0 0
    %262 = vmatprep.mubr.bf16.mxu0 0
    %263 = vmatmul.mubr.bf16.gmra.mrb[0].mxu0 %v228
    %v264 = vpop.f32.mrb[0].mxu0
    %v265 = vadd.f32 0.0, %v264
    %v266 = vpop.f32.mrb[0].mxu0
    %v267 = vpop.f32.mrb[0].mxu0
    %v268 = vadd.f32 0.0, %v267
    %v269 = vpop.f32.mrb[0].mxu0
    %270 = vdwg.mxu0
    %v271 = vpack.c.bf16 %v268, %v265
    %v272 = vld [vmem:[%s5] sm:$0x1]
    %v274 = vlaneseq
    %v275 = vshrl.u32 %v274, 7
    %v276 = vsub.s32 0, %v275
    %v277 = vrot.slane %v272, %v276
    %279 = vmatprep.subr.bf16.mxu0 0
    %280 = vmatpush1.bf16.msra.mxu0 %v271
    %281 = vmatprep.subr.bf16.mxu0 0
    %282 = vmatpush1.bf16.msra.mxu0 0
    %283 = vmatprep.subr.bf16.mxu0 0
    %284 = vmatpush1.bf16.msra.mxu0 0
    %285 = vmatprep.subr.bf16.mxu0 0
    %286 = vmatpush1.bf16.msra.mxu0 0
    %287 = vmatprep.subr.bf16.mxu0 0
    %288 = vmatpush1.bf16.msra.mxu0 0
    %289 = vmatprep.subr.bf16.mxu0 0
    %290 = vmatpush1.bf16.msra.mxu0 0
    %291 = vmatprep.subr.bf16.mxu0 0
    %292 = vmatpush1.bf16.msra.mxu0 0
    %293 = vmatprep.subr.bf16.mxu0 0
    %294 = vmatpush1.bf16.msra.mxu0 0
    %295 = vmatprep.subr.bf16.mxu0 0
    %296 = vmatpush1.bf16.msra.mxu0 0
    %297 = vmatprep.subr.bf16.mxu0 0
    %298 = vmatpush1.bf16.msra.mxu0 0
    %299 = vmatprep.subr.bf16.mxu0 0
    %300 = vmatpush1.bf16.msra.mxu0 0
    %301 = vmatprep.subr.bf16.mxu0 0
    %302 = vmatpush1.bf16.msra.mxu0 0
    %303 = vmatprep.subr.bf16.mxu0 0
    %304 = vmatpush1.bf16.msra.mxu0 0
    %305 = vmatprep.subr.bf16.mxu0 0
    %306 = vmatpush1.bf16.msra.mxu0 0
    %307 = vmatprep.subr.bf16.mxu0 0
    %308 = vmatpush1.bf16.msra.mxu0 0
    %309 = vmatprep.subr.bf16.mxu0 0
    %310 = vmatpush1.bf16.msra.mxu0 0
    %311 = vmatprep.mubr.bf16.mxu0 0
    %312 = vmatmul.mubr.bf16.gmra.mrb[0].mxu0 %v165
    %v313 = vpop.f32.mrb[0].mxu0
    %v314 = vadd.f32 %v277, %v313
    %v315 = vpop.f32.mrb[0].mxu0
    %v316 = vpop.f32.mrb[0].mxu0
    %v317 = vadd.f32 %v277, %v316
    %v318 = vpop.f32.mrb[0].mxu0
    %319 = vdwg.mxu0
    %v320 = vmax.f32 %v314, 0.0
    %v321 = vmax.f32 %v317, 0.0
    %v322 = vpack.c.bf16 %v321, %v320
    %v324 = vunpack.c.l.b16 %v322
    %v325 = vunpack.c.h.b16 %v322
    %v326 = vpack.c.b16 %v324, %v324
    %v327 = vpack.c.b16 %v325, %v325
    %vm330 = vcmask 257024
    %331 = vst.msk [vmem:[#allocation10] sm:$0xf] %vm330, %v326
    %332 = vst.msk [vmem:[#allocation10 + $0x4] sm:$0xf] %vm330, %v327
    // Predicated region
    $region42: #{tpu_custom_call.1} parent=1 // pred_check
      _
    $region43: #{tpu_custom_call.1} parent=1 // pred_check_branch
      %334 = sbr.rel (0) target = $region45
    $region44: #{tpu_custom_call.1} parent=1 // pred_region
      %s336 = ssub.s32 128, 128
      %337 = vsyncadd [#allocation4], %s336
      %s338 = sshll.u32 [#allocation10], 4
      %s339 = int_to_ptr.vmem [resolvable:$true] %s338
      %344 = dma.vmem_to_hbm [thread:$0]  %s339, 128, %s6, [#allocation4], 64, 64, 4
    $region45: #{tpu_custom_call.1} parent=1 // pred_fallthru
      _
    // Predicated region
    $region46: #{tpu_custom_call.1} parent=1 // pred_check
      _
    $region47: #{tpu_custom_call.1} parent=1 // pred_check_branch
      %346 = sbr.rel (0) target = $region49
    $region48: #{tpu_custom_call.1} parent=1 // pred_region
      %347 = dma.done [#allocation4], 128
    $region49: #{tpu_custom_call.1} parent=1 // pred_fallthru
      _
    %348 = vsyncpa [#allocation3], 1
    %349 = vsyncpa [#allocation6], 1
    %350 = vsyncpa [#allocation9], 1
    %351 = vsyncpa [#allocation4], 1

</llo_original>
